<compile_context>
chip_gen: v7x
topology: tpu7x:2x2x1
jax: 0.10.0
libtpu: 0.0.40
codegen_flags: <defaults>
</compile_context>

<pallas_src>
import functools

import numpy as np

import jax
import jax.numpy as jnp
from jax import lax
from jax.experimental import pallas as pl
from jax.experimental.pallas import tpu as pltpu


# Below this total size the per-step + launch overhead dominates and XLA's
# fused transpose wins; above it the tiled Pallas kernel is HBM-bound.
_MIN_PALLAS_BYTES_DEFAULT = 256 * 1024

# Planes smaller than this get batch-blocked (several planes per grid step).
_SMALL_PLANE_BYTES = 1 << 20


@functools.lru_cache(maxsize=1)
def _tile_config():
    """(tile_target, vmem_clamp_bytes, batch_block_bytes) per TPU generation."""
    try:
        kind = jax.devices()[0].device_kind.lower()
    except Exception:  # pragma: no cover - defensive on odd backends
        kind = ""
    if "7" in kind:
        # v7x: 3.2 TB/s HBM makes 512-class tiles step-overhead-bound; use
        # ~4 MiB f32 tiles.  64 MiB physical VMEM per TC -> clamp limit ~40 MiB.
        return 1024, 40 << 20, 4 << 20
    # v5e / v6e: 512-class tiles already sit ~85% of HBM roofline; 128 MiB VMEM.
    return 512, 64 << 20, 2 << 20


def _pick_tile(dim, target):
    """Largest lane-friendly tile: full dim, or a multiple of 128 <= target."""
    if dim <= target:
        return dim
    cand = target
    while cand >= target // 2:          # prefer a divisor (no ragged remainder)
        if dim % cand == 0:
            return cand
        cand -= 128
    return target                        # ragged edge handled by masked DMA


def _transpose_tile_kernel(x_ref, o_ref):
    # x_ref: (TL, TD) tile (batch dim squeezed); o_ref: (TD, TL) tile.
    # Pure on-chip XLU transpose of a VMEM-resident tile; TL/TD are multiples
    # of 128 (or full dims), so the output stores are lane-dense.
    # TODO(synk): for bf16/int8 on v7x, pack 2x/4x elements along D into u32
    # via pltpu.bitcast before transposing to halve/quarter the XLU op count.
    o_ref[...] = x_ref[...].T


def _transpose_batch_kernel(x_ref, o_ref):
    # x_ref: (BT, L, D); o_ref: (BT, D, L).  Many small planes per grid step:
    # one big DMA in/out, per-plane 2-D XLU transposes inside.
    bt = x_ref.shape[0]

    def body(b, carry):
        o_ref[b] = x_ref[b].T
        return carry

    lax.fori_loop(0, bt, body, 0)


def _pallas_swap_last2(x3):
    """(B, L, D) -> (B, D, L).  Caller guarantees L % 128 == 0."""
    B, L, D = x3.shape
    itemsize = jnp.dtype(x3.dtype).itemsize
    tile_target, vmem_clamp, batch_block_bytes = _tile_config()
    plane_bytes = L * D * itemsize

    if plane_bytes <= _SMALL_PLANE_BYTES and B > 1:
        # Many small (L, D) planes: amortize the ~0.35us/grid-step overhead by
        # moving several whole planes per step (keeps DMAs large).
        bt = int(max(1, min(B, batch_block_bytes // max(plane_bytes, 1), 256)))
        block_bytes = bt * plane_bytes
        vmem_limit = int(min(max(6 * block_bytes, 8 << 20), vmem_clamp))
        return pl.pallas_call(
            _transpose_batch_kernel,
            out_shape=jax.ShapeDtypeStruct((B, D, L), x3.dtype),
            grid=(pl.cdiv(B, bt),),
            in_specs=[pl.BlockSpec((bt, L, D), lambda b: (b, 0, 0))],
            out_specs=pl.BlockSpec((bt, D, L), lambda b: (b, 0, 0)),
            compiler_params=pltpu.CompilerParams(
                dimension_semantics=("parallel",),
                vmem_limit_bytes=vmem_limit,
            ),
        )(x3)

    tl = _pick_tile(L, tile_target)      # multiple of 128 (L % 128 == 0) or full L
    td = _pick_tile(D, tile_target)      # multiple of 128 or full D
    tile_bytes = tl * td * itemsize
    # Working set: double-buffered input + output tiles (~4x tile_bytes) plus
    # headroom; clamp per-generation (v7x has only 64 MiB physical VMEM).
    vmem_limit = int(min(max(6 * tile_bytes, 8 << 20), vmem_clamp))

    # L-tile index innermost: consecutive steps write adjacent 128-lane column
    # ranges of the same output rows (better HBM write locality).
    grid = (B, pl.cdiv(D, td), pl.cdiv(L, tl))

    return pl.pallas_call(
        _transpose_tile_kernel,
        out_shape=jax.ShapeDtypeStruct((B, D, L), x3.dtype),
        grid=grid,
        in_specs=[
            pl.BlockSpec((pl.Squeezed(), tl, td), lambda b, j, i: (b, i, j))
        ],
        out_specs=pl.BlockSpec(
            (pl.Squeezed(), td, tl), lambda b, j, i: (b, j, i)
        ),
        compiler_params=pltpu.CompilerParams(
            # No accumulator: every grid point writes a distinct output block,
            # so all axes are parallel (lets v7x shard across both TCs).
            dimension_semantics=("parallel", "parallel", "parallel"),
            vmem_limit_bytes=vmem_limit,
        ),
    )(x3)


def pallas_transpose(x, dim0, dim1, *, min_pallas_bytes=_MIN_PALLAS_BYTES_DEFAULT):
    """Equivalent of torch.Tensor.transpose(dim0, dim1) (the Transpose module)."""
    ndim = x.ndim
    d0, d1 = sorted((dim0 % ndim, dim1 % ndim))
    if d0 == d1:
        return x

    total_bytes = x.size * jnp.dtype(x.dtype).itemsize
    trailing_swap = (d0 == ndim - 2) and (d1 == ndim - 1)
    L = x.shape[-2] if ndim >= 2 else 1
    lane_dense = (L > 0) and (L % 128 == 0)

    if (not trailing_swap) or (not lane_dense) or (total_bytes < min_pallas_bytes):
        # Non-trailing permutes force cross-sublane relayouts with zero fusion
        # benefit; L not a multiple of 128 would hit masked (vst.msk) stores;
        # tiny tensors are overhead-dominated.  XLA wins in all three cases.
        # TODO(synk): where this Transpose feeds a matmul/Conv1d, fold the
        # permutation into the consumer instead of materializing the copy.
        return jnp.swapaxes(x, d0, d1)

    # Collapse all leading dims into one batch axis, transpose, restore.
    lead = x.shape[:-2]
    D = x.shape[-1]
    B = int(np.prod(lead)) if lead else 1
    y3 = _pallas_swap_last2(x.reshape(B, L, D))
    return y3.reshape(*lead, D, L)


if __name__ == "__main__":
    key = jax.random.PRNGKey(0)
    k1, k2, k3, k4, k5 = jax.random.split(key, 5)

    # 1) Module-scale small shape (B, L, D) = (2, 8, 32), Transpose(1, 2):
    #    lane gate / size gate route it to the XLA fallback, semantics intact.
    x = jax.random.normal(k1, (2, 8, 32), dtype=jnp.float32)
    out1 = jax.block_until_ready(pallas_transpose(x, 1, 2))
    np.testing.assert_array_equal(np.asarray(out1), np.asarray(jnp.swapaxes(x, 1, 2)))

    # 2) Tiled Pallas path with a ragged L edge: L = 640 (> 512-class tile).
    y = jax.random.normal(k2, (2, 640, 512), dtype=jnp.float32)
    out2 = jax.block_until_ready(pallas_transpose(y, 1, 2))
    np.testing.assert_array_equal(np.asarray(out2), np.asarray(jnp.swapaxes(y, 1, 2)))

    # 3) bf16 Pallas path (small planes -> batch-blocked kernel).
    z = jax.random.normal(k3, (2, 256, 384), dtype=jnp.bfloat16)
    out3 = jax.block_until_ready(pallas_transpose(z, -2, -1))
    np.testing.assert_array_equal(np.asarray(out3), np.asarray(jnp.swapaxes(z, 1, 2)))

    # 4) Batch-blocked Pallas path: many small (128, 96) planes.
    w = jax.random.normal(k4, (64, 128, 96), dtype=jnp.float32)
    out4 = jax.block_until_ready(pallas_transpose(w, 1, 2))
    np.testing.assert_array_equal(np.asarray(out4), np.asarray(jnp.swapaxes(w, 1, 2)))

    # 5) Non-trailing swap on a 4-D tensor: XLA fallback keeps module semantics.
    v = jax.random.normal(k5, (2, 4, 16, 16), dtype=jnp.float32)
    out5 = jax.block_until_ready(pallas_transpose(v, 1, 3))
    np.testing.assert_array_equal(np.asarray(out5), np.asarray(jnp.swapaxes(v, 1, 3)))

    print("KERNEL_OK")
</pallas_src>

<mosaic_0001>
module attributes {stable_mosaic.version = 11 : i64} {
  func.func @_transpose_tile_kernel(%arg0: i32, %arg1: i32, %arg2: i32, %arg3: memref<1x512x512xf32, #tpu.memory_space<vmem>>, %arg4: memref<1x512x512xf32, #tpu.memory_space<vmem>>) attributes {dimension_semantics = [#tpu.dimension_semantics<parallel>, #tpu.dimension_semantics<parallel>, #tpu.dimension_semantics<parallel>], iteration_bounds = array<i64: 2, 1, 2>, scalar_prefetch = 0 : i64, scratch_operands = 0 : i64, tpu.core_type = #tpu.core_type<tc>, window_params = [{transform_indices = @transform_0, window_bounds = array<i64: 1, 512, 512>}, {transform_indices = @transform_1, window_bounds = array<i64: 1, 512, 512>}]} {
    %c0 = arith.constant 0 : index
    %c0_0 = arith.constant 0 : index
    %c0_1 = arith.constant 0 : index
    %0 = vector.load %arg3[%c0, %c0_0, %c0_1] : memref<1x512x512xf32, #tpu.memory_space<vmem>>, vector<1x512x512xf32>
    %1 = vector.shape_cast %0 : vector<1x512x512xf32> to vector<512x512xf32>
    %2 = tpu.transpose %1, [1, 0] : vector<512x512xf32> -> vector<512x512xf32>
    %c0_2 = arith.constant 0 : index
    %c0_3 = arith.constant 0 : index
    %c0_4 = arith.constant 0 : index
    %3 = vector.load %arg4[%c0_2, %c0_3, %c0_4] : memref<1x512x512xf32, #tpu.memory_space<vmem>>, vector<1x512x512xf32>
    %4 = vector.shape_cast %3 : vector<1x512x512xf32> to vector<512x512xf32>
    %5 = vector.shape_cast %2 : vector<512x512xf32> to vector<1x512x512xf32>
    tpu.vector_store %arg4[%c0_2, %c0_3, %c0_4], %5 {strides = array<i32>} : memref<1x512x512xf32, #tpu.memory_space<vmem>>, vector<1x512x512xf32>,
    return
  }
  func.func @transform_0(%arg0: i32, %arg1: i32, %arg2: i32) -> (i32, i32, i32) {
    %c0_i32 = arith.constant 0 : i32
    return %arg0, %arg2, %arg1 : i32, i32, i32
  }
  func.func @transform_1(%arg0: i32, %arg1: i32, %arg2: i32) -> (i32, i32, i32) {
    %c0_i32 = arith.constant 0 : i32
    return %arg0, %arg1, %arg2 : i32, i32, i32
  }
}

</mosaic_0001>

<llo_original>
// kernel: tpu_custom_call.1
$region0: #{tpu_custom_call.1}
  #allocation0 [shape = 'u32[]', space=smem, size = 0x4, offset = 0x4, fixed_abs, tag = 'smem constant byte address 0x4 - core index']
  #allocation1 [shape = 'u32[144,128]{1,0:T(1,128)}', space=vmem, size = 0x12000, scoped, tag = 'internal scratch']
  %s0 = inlined_call_operand.hbm [shape: f32[2,640,512], index: 0, kind: input, shape index: {}]
  %s1 = inlined_call_operand.hbm [shape: f32[2,512,640], index: 1, kind: output, shape index: {}]
  %s2 = sld [smem:[#allocation0]]
  $region41: #{tpu_custom_call.1} parent=0
    _
  %s4 = ssub.s32 1, %s2
  %s5 = scalar_select 0, %s4, %s2
  $region1: #{tpu_custom_call.1} parent=0
    #allocation2 [shape = 'u8[2097152]{0}', space=vmem, size = 0x200000, scoped, tag = 'input window, operand 0']
    #allocation3 [shape = 's32[2]{0}', space=sflag, size = 0x8, scoped, tag = 'scoped memory for tpu_custom_call.1']
    #allocation4 [shape = 's32[2]{0}', space=sflag, size = 0x8, scoped, tag = 'scoped memory for tpu_custom_call.1']
    #allocation5 [shape = 'u8[2097152]{0}', space=vmem, size = 0x200000, scoped, tag = 'output window, operand 0']
    %6 = vsyncpa [#allocation3], 0
    %s7 = scalar_lea.sflag [#allocation3], 1
    %8 = vsyncpa %s7, 0
    %9 = vsyncpa [#allocation4], 0
    %s10 = scalar_lea.sflag [#allocation4], 1
    %11 = vsyncpa %s10, 0
    loop: start=0, step=1, limit=6
    $region2: #{tpu_custom_call.1} parent=1 // loop_pre_header
      _
    $region3: #{tpu_custom_call.1} parent=1 // loop_header
      %s13 = sphi 0, %s17
      %p14 = scmp.ge.s32.totalorder %s13, 6
      %s20 = sphi 0, %s39
      %s21 = sphi 0, %s35
      %s22 = sphi 0, %s31
      %s23 = sphi 0, %s20
      %s24 = sphi 0, %s21
      %s25 = sphi 0, %s22
      %s26 = sphi 0, %s23
      %s27 = sphi 0, %s24
      %s28 = sphi 0, %s25
      %s46 = sphi 0, %s48
      %s49 = sphi 0, %s46
      %s50 = sphi 0, %s49
      %s66 = sphi 0, %s50
      %s76 = sphi 0, %s78
      %s79 = sphi 0, %s76
      %s80 = sphi 0, %s79
      %s96 = sphi 0, %s80
    $region4: #{tpu_custom_call.1} parent=1 // loop_header_branch
      %16 = sbr.rel (%p14) target = $region8
    $region5: #{tpu_custom_call.1} parent=1 // loop_body
      %s18 = ssub.s32 %s13, 1
      %s19 = ssub.s32 %s13, 2
      %s29 = sadd.s32 1, %s22
      %p30 = scmp.ge.s32.totalorder %s29, 2
      %s31 = scalar_select %p30, 0, %s29
      %s32 = sadd.s32 1, %s21
      %s33 = scalar_select %p30, %s32, %s21
      %p34 = scmp.ge.s32.totalorder %s33, 1
      %s35 = scalar_select %p34, 0, %s33
      %s36 = sadd.s32 1, %s20
      %s37 = scalar_select %p34, %s36, %s20
      %p38 = scmp.ge.s32.totalorder %s37, 2
      %s39 = scalar_select %p38, 0, %s37
      %s40 = ssub.s32 %s20, %s39
      %s41 = ssub.s32 %s22, %s31
      %s42 = sor.u32 %s40, %s41
      %s43 = ssub.s32 %s21, %s35
      %s44 = sor.u32 %s42, %s43
      %p45 = scmp.eq.s32.totalorder %s44, 0
      %s47 = sadd.s32 %s46, 1
      %s48 = scalar_select %p45, %s46, %s47
      %p51 = pneg %p45
      %p52 = scmp.eq.s32.totalorder %s13, 3
      %p53 = por %p51, %p52
      %p54 = scmp.ne.s32.totalorder %s46, %s49
      %p55 = scmp.eq.s32.totalorder %s13, 0
      %p56 = por %p54, %p55
      %p57 = scmp.ne.s32.totalorder %s46, %s49
      %p58 = scmp.eq.s32.totalorder %s18, 3
      %p59 = por %p57, %p58
      %p60 = scmp.ne.s32.totalorder %s49, %s50
      %p61 = scmp.eq.s32.totalorder %s18, 0
      %p62 = por %p60, %p61
      %p63 = scmp.ne.s32.totalorder %s49, %s50
      %p64 = scmp.eq.s32.totalorder %s19, 3
      %p65 = por %p63, %p64
      %p67 = scmp.ne.s32.totalorder %s50, %s66
      %p68 = scmp.eq.s32.totalorder %s19, 0
      %p69 = por %p67, %p68
      %s70 = ssub.s32 %s20, %s39
      %s71 = ssub.s32 %s21, %s35
      %s72 = sor.u32 %s70, %s71
      %s73 = ssub.s32 %s22, %s31
      %s74 = sor.u32 %s72, %s73
      %p75 = scmp.eq.s32.totalorder %s74, 0
      %s77 = sadd.s32 %s76, 1
      %s78 = scalar_select %p75, %s76, %s77
      %p81 = pneg %p75
      %p82 = scmp.eq.s32.totalorder %s13, 3
      %p83 = por %p81, %p82
      %p84 = scmp.ne.s32.totalorder %s76, %s79
      %p85 = scmp.eq.s32.totalorder %s13, 0
      %p86 = por %p84, %p85
      %p87 = scmp.ne.s32.totalorder %s76, %s79
      %p88 = scmp.eq.s32.totalorder %s18, 3
      %p89 = por %p87, %p88
      %p90 = scmp.ne.s32.totalorder %s79, %s80
      %p91 = scmp.eq.s32.totalorder %s18, 0
      %p92 = por %p90, %p91
      %p93 = scmp.ne.s32.totalorder %s79, %s80
      %p94 = scmp.eq.s32.totalorder %s19, 3
      %p95 = por %p93, %p94
      %p97 = scmp.ne.s32.totalorder %s80, %s96
      %p98 = scmp.eq.s32.totalorder %s19, 0
      %p99 = por %p97, %p98
      %p100 = scmp.le.s32.totalorder 1, %s13
      %p101 = scmp.lt.s32.totalorder %s13, 5
      %p102 = pnand %p100, %p101
      %p103 = pneg %p102
      // Predicated region
      $region9: #{tpu_custom_call.1} parent=5 // pred_check
        _
      $region10: #{tpu_custom_call.1} parent=5 // pred_check_branch
        %105 = sbr.rel (%p102) target = $region12
      $region11: #{tpu_custom_call.1} parent=5 // pred_region
        %s106 = ssub.s32 %s13, 1
      $region12: #{tpu_custom_call.1} parent=5 // pred_fallthru
        _
      %p107 = scmp.lt.s32.totalorder %s13, 4
      // Predicated region
      $region13: #{tpu_custom_call.1} parent=5 // pred_check
        %p108 = pneg %p107
      $region14: #{tpu_custom_call.1} parent=5 // pred_check_branch
        %110 = sbr.rel (%p108) target = $region16
      $region15: #{tpu_custom_call.1} parent=5 // pred_region
        // Predicated region
        $region17: #{tpu_custom_call.1} parent=15 // pred_check
          %p111 = pneg %p56
        $region18: #{tpu_custom_call.1} parent=15 // pred_check_branch
          %113 = sbr.rel (%p111) target = $region20
        $region19: #{tpu_custom_call.1} parent=15 // pred_region
          %s114 = sand.u32 %s46, 1
          %s115 = scalar_lea.sflag [#allocation3], %s114
          %s116 = sand.u32 %s46, 1
          %s117 = smul.addr %s116, 2048
          %s118 = scalar_lea.vmem [#allocation2], %s117
          %s119 = smul.u32 64, %s22
          %s120 = smul.u32 4, %s21
          %s121 = ssub.s32 80, %s119
          %p122 = scmp.lt.s32.totalorder %s121, 64
          %s123 = scalar_select %p122, %s121, 64
          %s124 = smul.u32 128, %s123
          %s125 = smul.u32 %s124, 4
          %s127 = ssub.s32 32768, %s125
          %128 = vsyncadd %s115, %s127
          %p129 = scmp.ne.s32.totalorder 0, %s125
          %s130 = smul.addr %s119, 4
          %s131 = sadd.s32 %s120, %s130
          %s132 = smul.addr %s20, 320
          %s133 = sadd.s32 %s131, %s132
          %s134 = smul.addr %s133, 128
          %s135 = scalar_lea.hbm %s0, %s134
          %s136 = smul.u32 32, %s123
          %s137 = sshll.u32 %s118, 4
          %s138 = int_to_ptr.vmem [resolvable:$true] %s137
          %s139 = sshll.u32 %s136, 4
          %143 = dma.hbm_to_vmem [thread:$0]  (%p129), %s135, %s139, %s138, %s115, 512, 512, 32
        $region20: #{tpu_custom_call.1} parent=15 // pred_fallthru
          _
      $region16: #{tpu_custom_call.1} parent=5 // pred_fallthru
        _
      %p144 = scmp.le.s32.totalorder 1, %s13
      %p145 = scmp.lt.s32.totalorder %s13, 5
      %p146 = pnand %p144, %p145
      %p147 = pneg %p146
      // Predicated region
      $region21: #{tpu_custom_call.1} parent=5 // pred_check
        _
      $region22: #{tpu_custom_call.1} parent=5 // pred_check_branch
        %149 = sbr.rel (%p146) target = $region24
      $region23: #{tpu_custom_call.1} parent=5 // pred_region
        %s150 = ssub.s32 %s13, 1
        %s151 = sand.u32 %s49, 1
        %s152 = scalar_lea.sflag [#allocation3], %s151
        %s153 = sand.u32 %s49, 1
        %s154 = smul.addr %s153, 2048
        %s155 = scalar_lea.vmem [#allocation2], %s154
        // Predicated region
        $region25: #{tpu_custom_call.1} parent=23 // pred_check
          %p156 = pneg %p62
        $region26: #{tpu_custom_call.1} parent=23 // pred_check_branch
          %158 = sbr.rel (%p156) target = $region28
        $region27: #{tpu_custom_call.1} parent=23 // pred_region
          %159 = dma.done %s152, 32768
        $region28: #{tpu_custom_call.1} parent=23 // pred_fallthru
          _
        %s160 = sand.u32 %s49, 1
        %s161 = scalar_lea.sflag [#allocation3], %s160
        %s162 = sand.u32 %s49, 1
        %s163 = smul.addr %s162, 2048
        %s164 = scalar_lea.vmem [#allocation2], %s163
        %p165 = pneg %p62
        %p166 = pneg %p59
        %p167 = pneg %p92
        %p168 = pneg %p89
        %s169 = sand.u32 %s79, 1
        %s170 = scalar_lea.sflag [#allocation4], %s169
        %s171 = sand.u32 %s79, 1
        %s172 = smul.addr %s171, 2048
        %s173 = scalar_lea.vmem [#allocation5], %s172
        %s174 = smul.u32 64, %s25
        %s175 = smul.u32 4, %s24
        %s176 = ssub.s32 80, %s174
        %p177 = scmp.lt.s32.totalorder %s176, 64
        %s178 = scalar_select %p177, %s176, 64
        %s179 = smul.u32 128, %s178
        %s180 = smul.u32 %s179, 4
        %s181 = smul.u32 64, %s24
        %s182 = smul.u32 4, %s25
        %s183 = ssub.s32 5, %s182
        %p184 = scmp.lt.s32.totalorder %s183, 4
        %s185 = scalar_select %p184, %s183, 4
        %s186 = smul.u32 8192, %s185
        %v187 = vld [vmem:[%s155] sm:$0xff]
        %v188 = vld [vmem:[%s155 + $0x8] sm:$0xff]
        %v189 = vld [vmem:[%s155 + $0x10] sm:$0xff]
        %v190 = vld [vmem:[%s155 + $0x18] sm:$0xff]
        %v191 = vld [vmem:[%s155 + $0x20] sm:$0xff]
        %v192 = vld [vmem:[%s155 + $0x28] sm:$0xff]
        %v193 = vld [vmem:[%s155 + $0x30] sm:$0xff]
        %v194 = vld [vmem:[%s155 + $0x38] sm:$0xff]
        %v195 = vld [vmem:[%s155 + $0x40] sm:$0xff]
        %v196 = vld [vmem:[%s155 + $0x48] sm:$0xff]
        %v197 = vld [vmem:[%s155 + $0x50] sm:$0xff]
        %v198 = vld [vmem:[%s155 + $0x58] sm:$0xff]
        %v199 = vld [vmem:[%s155 + $0x60] sm:$0xff]
        %v200 = vld [vmem:[%s155 + $0x68] sm:$0xff]
        %v201 = vld [vmem:[%s155 + $0x70] sm:$0xff]
        %v202 = vld [vmem:[%s155 + $0x78] sm:$0xff]
        %v203 = vld [vmem:[%s155 + $0x80] sm:$0xff]
        %v204 = vld [vmem:[%s155 + $0x88] sm:$0xff]
        %v205 = vld [vmem:[%s155 + $0x90] sm:$0xff]
        %v206 = vld [vmem:[%s155 + $0x98] sm:$0xff]
        %v207 = vld [vmem:[%s155 + $0xa0] sm:$0xff]
        %v208 = vld [vmem:[%s155 + $0xa8] sm:$0xff]
        %v209 = vld [vmem:[%s155 + $0xb0] sm:$0xff]
        %v210 = vld [vmem:[%s155 + $0xb8] sm:$0xff]
        %v211 = vld [vmem:[%s155 + $0xc0] sm:$0xff]
        %v212 = vld [vmem:[%s155 + $0xc8] sm:$0xff]
        %v213 = vld [vmem:[%s155 + $0xd0] sm:$0xff]
        %v214 = vld [vmem:[%s155 + $0xd8] sm:$0xff]
        %v215 = vld [vmem:[%s155 + $0xe0] sm:$0xff]
        %v216 = vld [vmem:[%s155 + $0xe8] sm:$0xff]
        %v217 = vld [vmem:[%s155 + $0xf0] sm:$0xff]
        %v218 = vld [vmem:[%s155 + $0xf8] sm:$0xff]
        %v219 = vld [vmem:[%s155 + $0x100] sm:$0xff]
        %v220 = vld [vmem:[%s155 + $0x108] sm:$0xff]
        %v221 = vld [vmem:[%s155 + $0x110] sm:$0xff]
        %v222 = vld [vmem:[%s155 + $0x118] sm:$0xff]
        %v223 = vld [vmem:[%s155 + $0x120] sm:$0xff]
        %v224 = vld [vmem:[%s155 + $0x128] sm:$0xff]
        %v225 = vld [vmem:[%s155 + $0x130] sm:$0xff]
        %v226 = vld [vmem:[%s155 + $0x138] sm:$0xff]
        %v227 = vld [vmem:[%s155 + $0x140] sm:$0xff]
        %v228 = vld [vmem:[%s155 + $0x148] sm:$0xff]
        %v229 = vld [vmem:[%s155 + $0x150] sm:$0xff]
        %v230 = vld [vmem:[%s155 + $0x158] sm:$0xff]
        %v231 = vld [vmem:[%s155 + $0x160] sm:$0xff]
        %v232 = vld [vmem:[%s155 + $0x168] sm:$0xff]
        %v233 = vld [vmem:[%s155 + $0x170] sm:$0xff]
        %v234 = vld [vmem:[%s155 + $0x178] sm:$0xff]
        %v235 = vld [vmem:[%s155 + $0x180] sm:$0xff]
        %v236 = vld [vmem:[%s155 + $0x188] sm:$0xff]
        %v237 = vld [vmem:[%s155 + $0x190] sm:$0xff]
        %v238 = vld [vmem:[%s155 + $0x198] sm:$0xff]
        %v239 = vld [vmem:[%s155 + $0x1a0] sm:$0xff]
        %v240 = vld [vmem:[%s155 + $0x1a8] sm:$0xff]
        %v241 = vld [vmem:[%s155 + $0x1b0] sm:$0xff]
        %v242 = vld [vmem:[%s155 + $0x1b8] sm:$0xff]
        %v243 = vld [vmem:[%s155 + $0x1c0] sm:$0xff]
        %v244 = vld [vmem:[%s155 + $0x1c8] sm:$0xff]
        %v245 = vld [vmem:[%s155 + $0x1d0] sm:$0xff]
        %v246 = vld [vmem:[%s155 + $0x1d8] sm:$0xff]
        %v247 = vld [vmem:[%s155 + $0x1e0] sm:$0xff]
        %v248 = vld [vmem:[%s155 + $0x1e8] sm:$0xff]
        %v249 = vld [vmem:[%s155 + $0x1f0] sm:$0xff]
        %v250 = vld [vmem:[%s155 + $0x1f8] sm:$0xff]
        %v251 = vld [vmem:[%s155 + $0x200] sm:$0xff]
        %v252 = vld [vmem:[%s155 + $0x208] sm:$0xff]
        %v253 = vld [vmem:[%s155 + $0x210] sm:$0xff]
        %v254 = vld [vmem:[%s155 + $0x218] sm:$0xff]
        %v255 = vld [vmem:[%s155 + $0x220] sm:$0xff]
        %v256 = vld [vmem:[%s155 + $0x228] sm:$0xff]
        %v257 = vld [vmem:[%s155 + $0x230] sm:$0xff]
        %v258 = vld [vmem:[%s155 + $0x238] sm:$0xff]
        %v259 = vld [vmem:[%s155 + $0x240] sm:$0xff]
        %v260 = vld [vmem:[%s155 + $0x248] sm:$0xff]
        %v261 = vld [vmem:[%s155 + $0x250] sm:$0xff]
        %v262 = vld [vmem:[%s155 + $0x258] sm:$0xff]
        %v263 = vld [vmem:[%s155 + $0x260] sm:$0xff]
        %v264 = vld [vmem:[%s155 + $0x268] sm:$0xff]
        %v265 = vld [vmem:[%s155 + $0x270] sm:$0xff]
        %v266 = vld [vmem:[%s155 + $0x278] sm:$0xff]
        %v267 = vld [vmem:[%s155 + $0x280] sm:$0xff]
        %v268 = vld [vmem:[%s155 + $0x288] sm:$0xff]
        %v269 = vld [vmem:[%s155 + $0x290] sm:$0xff]
        %v270 = vld [vmem:[%s155 + $0x298] sm:$0xff]
        %v271 = vld [vmem:[%s155 + $0x2a0] sm:$0xff]
        %v272 = vld [vmem:[%s155 + $0x2a8] sm:$0xff]
        %v273 = vld [vmem:[%s155 + $0x2b0] sm:$0xff]
        %v274 = vld [vmem:[%s155 + $0x2b8] sm:$0xff]
        %v275 = vld [vmem:[%s155 + $0x2c0] sm:$0xff]
        %v276 = vld [vmem:[%s155 + $0x2c8] sm:$0xff]
        %v277 = vld [vmem:[%s155 + $0x2d0] sm:$0xff]
        %v278 = vld [vmem:[%s155 + $0x2d8] sm:$0xff]
        %v279 = vld [vmem:[%s155 + $0x2e0] sm:$0xff]
        %v280 = vld [vmem:[%s155 + $0x2e8] sm:$0xff]
        %v281 = vld [vmem:[%s155 + $0x2f0] sm:$0xff]
        %v282 = vld [vmem:[%s155 + $0x2f8] sm:$0xff]
        %v283 = vld [vmem:[%s155 + $0x300] sm:$0xff]
        %v284 = vld [vmem:[%s155 + $0x308] sm:$0xff]
        %v285 = vld [vmem:[%s155 + $0x310] sm:$0xff]
        %v286 = vld [vmem:[%s155 + $0x318] sm:$0xff]
        %v287 = vld [vmem:[%s155 + $0x320] sm:$0xff]
        %v288 = vld [vmem:[%s155 + $0x328] sm:$0xff]
        %v289 = vld [vmem:[%s155 + $0x330] sm:$0xff]
        %v290 = vld [vmem:[%s155 + $0x338] sm:$0xff]
        %v291 = vld [vmem:[%s155 + $0x340] sm:$0xff]
        %v292 = vld [vmem:[%s155 + $0x348] sm:$0xff]
        %v293 = vld [vmem:[%s155 + $0x350] sm:$0xff]
        %v294 = vld [vmem:[%s155 + $0x358] sm:$0xff]
        %v295 = vld [vmem:[%s155 + $0x360] sm:$0xff]
        %v296 = vld [vmem:[%s155 + $0x368] sm:$0xff]
        %v297 = vld [vmem:[%s155 + $0x370] sm:$0xff]
        %v298 = vld [vmem:[%s155 + $0x378] sm:$0xff]
        %v299 = vld [vmem:[%s155 + $0x380] sm:$0xff]
        %v300 = vld [vmem:[%s155 + $0x388] sm:$0xff]
        %v301 = vld [vmem:[%s155 + $0x390] sm:$0xff]
        %v302 = vld [vmem:[%s155 + $0x398] sm:$0xff]
        %v303 = vld [vmem:[%s155 + $0x3a0] sm:$0xff]
        %v304 = vld [vmem:[%s155 + $0x3a8] sm:$0xff]
        %v305 = vld [vmem:[%s155 + $0x3b0] sm:$0xff]
        %v306 = vld [vmem:[%s155 + $0x3b8] sm:$0xff]
        %v307 = vld [vmem:[%s155 + $0x3c0] sm:$0xff]
        %v308 = vld [vmem:[%s155 + $0x3c8] sm:$0xff]
        %v309 = vld [vmem:[%s155 + $0x3d0] sm:$0xff]
        %v310 = vld [vmem:[%s155 + $0x3d8] sm:$0xff]
        %v311 = vld [vmem:[%s155 + $0x3e0] sm:$0xff]
        %v312 = vld [vmem:[%s155 + $0x3e8] sm:$0xff]
        %v313 = vld [vmem:[%s155 + $0x3f0] sm:$0xff]
        %v314 = vld [vmem:[%s155 + $0x3f8] sm:$0xff]
        %v315 = vld [vmem:[%s155 + $0x400] sm:$0xff]
        %v316 = vld [vmem:[%s155 + $0x408] sm:$0xff]
        %v317 = vld [vmem:[%s155 + $0x410] sm:$0xff]
        %v318 = vld [vmem:[%s155 + $0x418] sm:$0xff]
        %v319 = vld [vmem:[%s155 + $0x420] sm:$0xff]
        %v320 = vld [vmem:[%s155 + $0x428] sm:$0xff]
        %v321 = vld [vmem:[%s155 + $0x430] sm:$0xff]
        %v322 = vld [vmem:[%s155 + $0x438] sm:$0xff]
        %v323 = vld [vmem:[%s155 + $0x440] sm:$0xff]
        %v324 = vld [vmem:[%s155 + $0x448] sm:$0xff]
        %v325 = vld [vmem:[%s155 + $0x450] sm:$0xff]
        %v326 = vld [vmem:[%s155 + $0x458] sm:$0xff]
        %v327 = vld [vmem:[%s155 + $0x460] sm:$0xff]
        %v328 = vld [vmem:[%s155 + $0x468] sm:$0xff]
        %v329 = vld [vmem:[%s155 + $0x470] sm:$0xff]
        %v330 = vld [vmem:[%s155 + $0x478] sm:$0xff]
        %v331 = vld [vmem:[%s155 + $0x480] sm:$0xff]
        %v332 = vld [vmem:[%s155 + $0x488] sm:$0xff]
        %v333 = vld [vmem:[%s155 + $0x490] sm:$0xff]
        %v334 = vld [vmem:[%s155 + $0x498] sm:$0xff]
        %v335 = vld [vmem:[%s155 + $0x4a0] sm:$0xff]
        %v336 = vld [vmem:[%s155 + $0x4a8] sm:$0xff]
        %v337 = vld [vmem:[%s155 + $0x4b0] sm:$0xff]
        %v338 = vld [vmem:[%s155 + $0x4b8] sm:$0xff]
        %v339 = vld [vmem:[%s155 + $0x4c0] sm:$0xff]
        %v340 = vld [vmem:[%s155 + $0x4c8] sm:$0xff]
        %v341 = vld [vmem:[%s155 + $0x4d0] sm:$0xff]
        %v342 = vld [vmem:[%s155 + $0x4d8] sm:$0xff]
        %v343 = vld [vmem:[%s155 + $0x4e0] sm:$0xff]
        %v344 = vld [vmem:[%s155 + $0x4e8] sm:$0xff]
        %v345 = vld [vmem:[%s155 + $0x4f0] sm:$0xff]
        %v346 = vld [vmem:[%s155 + $0x4f8] sm:$0xff]
        %v347 = vld [vmem:[%s155 + $0x500] sm:$0xff]
        %v348 = vld [vmem:[%s155 + $0x508] sm:$0xff]
        %v349 = vld [vmem:[%s155 + $0x510] sm:$0xff]
        %v350 = vld [vmem:[%s155 + $0x518] sm:$0xff]
        %v351 = vld [vmem:[%s155 + $0x520] sm:$0xff]
        %v352 = vld [vmem:[%s155 + $0x528] sm:$0xff]
        %v353 = vld [vmem:[%s155 + $0x530] sm:$0xff]
        %v354 = vld [vmem:[%s155 + $0x538] sm:$0xff]
        %v355 = vld [vmem:[%s155 + $0x540] sm:$0xff]
        %v356 = vld [vmem:[%s155 + $0x548] sm:$0xff]
        %v357 = vld [vmem:[%s155 + $0x550] sm:$0xff]
        %v358 = vld [vmem:[%s155 + $0x558] sm:$0xff]
        %v359 = vld [vmem:[%s155 + $0x560] sm:$0xff]
        %v360 = vld [vmem:[%s155 + $0x568] sm:$0xff]
        %v361 = vld [vmem:[%s155 + $0x570] sm:$0xff]
        %v362 = vld [vmem:[%s155 + $0x578] sm:$0xff]
        %v363 = vld [vmem:[%s155 + $0x580] sm:$0xff]
        %v364 = vld [vmem:[%s155 + $0x588] sm:$0xff]
        %v365 = vld [vmem:[%s155 + $0x590] sm:$0xff]
        %v366 = vld [vmem:[%s155 + $0x598] sm:$0xff]
        %v367 = vld [vmem:[%s155 + $0x5a0] sm:$0xff]
        %v368 = vld [vmem:[%s155 + $0x5a8] sm:$0xff]
        %v369 = vld [vmem:[%s155 + $0x5b0] sm:$0xff]
        %v370 = vld [vmem:[%s155 + $0x5b8] sm:$0xff]
        %v371 = vld [vmem:[%s155 + $0x5c0] sm:$0xff]
        %v372 = vld [vmem:[%s155 + $0x5c8] sm:$0xff]
        %v373 = vld [vmem:[%s155 + $0x5d0] sm:$0xff]
        %v374 = vld [vmem:[%s155 + $0x5d8] sm:$0xff]
        %v375 = vld [vmem:[%s155 + $0x5e0] sm:$0xff]
        %v376 = vld [vmem:[%s155 + $0x5e8] sm:$0xff]
        %v377 = vld [vmem:[%s155 + $0x5f0] sm:$0xff]
        %v378 = vld [vmem:[%s155 + $0x5f8] sm:$0xff]
        %v379 = vld [vmem:[%s155 + $0x600] sm:$0xff]
        %v380 = vld [vmem:[%s155 + $0x608] sm:$0xff]
        %v381 = vld [vmem:[%s155 + $0x610] sm:$0xff]
        %v382 = vld [vmem:[%s155 + $0x618] sm:$0xff]
        %v383 = vld [vmem:[%s155 + $0x620] sm:$0xff]
        %v384 = vld [vmem:[%s155 + $0x628] sm:$0xff]
        %v385 = vld [vmem:[%s155 + $0x630] sm:$0xff]
        %v386 = vld [vmem:[%s155 + $0x638] sm:$0xff]
        %v387 = vld [vmem:[%s155 + $0x640] sm:$0xff]
        %v388 = vld [vmem:[%s155 + $0x648] sm:$0xff]
        %v389 = vld [vmem:[%s155 + $0x650] sm:$0xff]
        %v390 = vld [vmem:[%s155 + $0x658] sm:$0xff]
        %v391 = vld [vmem:[%s155 + $0x660] sm:$0xff]
        %v392 = vld [vmem:[%s155 + $0x668] sm:$0xff]
        %v393 = vld [vmem:[%s155 + $0x670] sm:$0xff]
        %v394 = vld [vmem:[%s155 + $0x678] sm:$0xff]
        %v395 = vld [vmem:[%s155 + $0x680] sm:$0xff]
        %v396 = vld [vmem:[%s155 + $0x688] sm:$0xff]
        %v397 = vld [vmem:[%s155 + $0x690] sm:$0xff]
        %v398 = vld [vmem:[%s155 + $0x698] sm:$0xff]
        %v399 = vld [vmem:[%s155 + $0x6a0] sm:$0xff]
        %v400 = vld [vmem:[%s155 + $0x6a8] sm:$0xff]
        %v401 = vld [vmem:[%s155 + $0x6b0] sm:$0xff]
        %v402 = vld [vmem:[%s155 + $0x6b8] sm:$0xff]
        %v403 = vld [vmem:[%s155 + $0x6c0] sm:$0xff]
        %v404 = vld [vmem:[%s155 + $0x6c8] sm:$0xff]
        %v405 = vld [vmem:[%s155 + $0x6d0] sm:$0xff]
        %v406 = vld [vmem:[%s155 + $0x6d8] sm:$0xff]
        %v407 = vld [vmem:[%s155 + $0x6e0] sm:$0xff]
        %v408 = vld [vmem:[%s155 + $0x6e8] sm:$0xff]
        %v409 = vld [vmem:[%s155 + $0x6f0] sm:$0xff]
        %v410 = vld [vmem:[%s155 + $0x6f8] sm:$0xff]
        %v411 = vld [vmem:[%s155 + $0x700] sm:$0xff]
        %v412 = vld [vmem:[%s155 + $0x708] sm:$0xff]
        %v413 = vld [vmem:[%s155 + $0x710] sm:$0xff]
        %v414 = vld [vmem:[%s155 + $0x718] sm:$0xff]
        %v415 = vld [vmem:[%s155 + $0x720] sm:$0xff]
        %v416 = vld [vmem:[%s155 + $0x728] sm:$0xff]
        %v417 = vld [vmem:[%s155 + $0x730] sm:$0xff]
        %v418 = vld [vmem:[%s155 + $0x738] sm:$0xff]
        %v419 = vld [vmem:[%s155 + $0x740] sm:$0xff]
        %v420 = vld [vmem:[%s155 + $0x748] sm:$0xff]
        %v421 = vld [vmem:[%s155 + $0x750] sm:$0xff]
        %v422 = vld [vmem:[%s155 + $0x758] sm:$0xff]
        %v423 = vld [vmem:[%s155 + $0x760] sm:$0xff]
        %v424 = vld [vmem:[%s155 + $0x768] sm:$0xff]
        %v425 = vld [vmem:[%s155 + $0x770] sm:$0xff]
        %v426 = vld [vmem:[%s155 + $0x778] sm:$0xff]
        %v427 = vld [vmem:[%s155 + $0x780] sm:$0xff]
        %v428 = vld [vmem:[%s155 + $0x788] sm:$0xff]
        %v429 = vld [vmem:[%s155 + $0x790] sm:$0xff]
        %v430 = vld [vmem:[%s155 + $0x798] sm:$0xff]
        %v431 = vld [vmem:[%s155 + $0x7a0] sm:$0xff]
        %v432 = vld [vmem:[%s155 + $0x7a8] sm:$0xff]
        %v433 = vld [vmem:[%s155 + $0x7b0] sm:$0xff]
        %v434 = vld [vmem:[%s155 + $0x7b8] sm:$0xff]
        %v435 = vld [vmem:[%s155 + $0x7c0] sm:$0xff]
        %v436 = vld [vmem:[%s155 + $0x7c8] sm:$0xff]
        %v437 = vld [vmem:[%s155 + $0x7d0] sm:$0xff]
        %v438 = vld [vmem:[%s155 + $0x7d8] sm:$0xff]
        %v439 = vld [vmem:[%s155 + $0x7e0] sm:$0xff]
        %v440 = vld [vmem:[%s155 + $0x7e8] sm:$0xff]
        %v441 = vld [vmem:[%s155 + $0x7f0] sm:$0xff]
        %v442 = vld [vmem:[%s155 + $0x7f8] sm:$0xff]
        %443 = vxpose.xlu0.b32.start [1/16] %v187, 128
        %444 = vxpose.xlu0.b32.cont [2/16] %v191, 128
        %445 = vxpose.xlu0.b32.cont [3/16] %v195, 128
        %446 = vxpose.xlu0.b32.cont [4/16] %v199, 128
        %447 = vxpose.xlu0.b32.cont [5/16] %v203, 128
        %448 = vxpose.xlu0.b32.cont [6/16] %v207, 128
        %449 = vxpose.xlu0.b32.cont [7/16] %v211, 128
        %450 = vxpose.xlu0.b32.cont [8/16] %v215, 128
        %451 = vxpose.xlu0.b32.cont [9/16] %v219, 128
        %452 = vxpose.xlu0.b32.cont [10/16] %v223, 128
        %453 = vxpose.xlu0.b32.cont [11/16] %v227, 128
        %454 = vxpose.xlu0.b32.cont [12/16] %v231, 128
        %455 = vxpose.xlu0.b32.cont [13/16] %v235, 128
        %456 = vxpose.xlu0.b32.cont [14/16] %v239, 128
        %457 = vxpose.xlu0.b32.cont [15/16] %v243, 128
        %458 = vxpose.xlu0.b32.end [16/16] %v247, 128
        %v459 = vpop.trf.xlu0
        %v460 = vpop.trf.xlu0
        %v461 = vpop.trf.xlu0
        %v462 = vpop.trf.xlu0
        %v463 = vpop.trf.xlu0
        %v464 = vpop.trf.xlu0
        %v465 = vpop.trf.xlu0
        %v466 = vpop.trf.xlu0
        %v467 = vpop.trf.xlu0
        %v468 = vpop.trf.xlu0
        %v469 = vpop.trf.xlu0
        %v470 = vpop.trf.xlu0
        %v471 = vpop.trf.xlu0
        %v472 = vpop.trf.xlu0
        %v473 = vpop.trf.xlu0
        %v474 = vpop.trf.xlu0
        %475 = vxpose.xlu0.b32.start [1/16] %v188, 128
        %476 = vxpose.xlu0.b32.cont [2/16] %v192, 128
        %477 = vxpose.xlu0.b32.cont [3/16] %v196, 128
        %478 = vxpose.xlu0.b32.cont [4/16] %v200, 128
        %479 = vxpose.xlu0.b32.cont [5/16] %v204, 128
        %480 = vxpose.xlu0.b32.cont [6/16] %v208, 128
        %481 = vxpose.xlu0.b32.cont [7/16] %v212, 128
        %482 = vxpose.xlu0.b32.cont [8/16] %v216, 128
        %483 = vxpose.xlu0.b32.cont [9/16] %v220, 128
        %484 = vxpose.xlu0.b32.cont [10/16] %v224, 128
        %485 = vxpose.xlu0.b32.cont [11/16] %v228, 128
        %486 = vxpose.xlu0.b32.cont [12/16] %v232, 128
        %487 = vxpose.xlu0.b32.cont [13/16] %v236, 128
        %488 = vxpose.xlu0.b32.cont [14/16] %v240, 128
        %489 = vxpose.xlu0.b32.cont [15/16] %v244, 128
        %490 = vxpose.xlu0.b32.end [16/16] %v248, 128
        %v491 = vpop.trf.xlu0
        %v492 = vpop.trf.xlu0
        %v493 = vpop.trf.xlu0
        %v494 = vpop.trf.xlu0
        %v495 = vpop.trf.xlu0
        %v496 = vpop.trf.xlu0
        %v497 = vpop.trf.xlu0
        %v498 = vpop.trf.xlu0
        %v499 = vpop.trf.xlu0
        %v500 = vpop.trf.xlu0
        %v501 = vpop.trf.xlu0
        %v502 = vpop.trf.xlu0
        %v503 = vpop.trf.xlu0
        %v504 = vpop.trf.xlu0
        %v505 = vpop.trf.xlu0
        %v506 = vpop.trf.xlu0
        %507 = vxpose.xlu0.b32.start [1/16] %v189, 128
        %508 = vxpose.xlu0.b32.cont [2/16] %v193, 128
        %509 = vxpose.xlu0.b32.cont [3/16] %v197, 128
        %510 = vxpose.xlu0.b32.cont [4/16] %v201, 128
        %511 = vxpose.xlu0.b32.cont [5/16] %v205, 128
        %512 = vxpose.xlu0.b32.cont [6/16] %v209, 128
        %513 = vxpose.xlu0.b32.cont [7/16] %v213, 128
        %514 = vxpose.xlu0.b32.cont [8/16] %v217, 128
        %515 = vxpose.xlu0.b32.cont [9/16] %v221, 128
        %516 = vxpose.xlu0.b32.cont [10/16] %v225, 128
        %517 = vxpose.xlu0.b32.cont [11/16] %v229, 128
        %518 = vxpose.xlu0.b32.cont [12/16] %v233, 128
        %519 = vxpose.xlu0.b32.cont [13/16] %v237, 128
        %520 = vxpose.xlu0.b32.cont [14/16] %v241, 128
        %521 = vxpose.xlu0.b32.cont [15/16] %v245, 128
        %522 = vxpose.xlu0.b32.end [16/16] %v249, 128
        %v523 = vpop.trf.xlu0
        %v524 = vpop.trf.xlu0
        %v525 = vpop.trf.xlu0
        %v526 = vpop.trf.xlu0
        %v527 = vpop.trf.xlu0
        %v528 = vpop.trf.xlu0
        %v529 = vpop.trf.xlu0
        %v530 = vpop.trf.xlu0
        %v531 = vpop.trf.xlu0
        %v532 = vpop.trf.xlu0
        %v533 = vpop.trf.xlu0
        %v534 = vpop.trf.xlu0
        %v535 = vpop.trf.xlu0
        %v536 = vpop.trf.xlu0
        %v537 = vpop.trf.xlu0
        %v538 = vpop.trf.xlu0
        %539 = vxpose.xlu0.b32.start [1/16] %v190, 128
        %540 = vxpose.xlu0.b32.cont [2/16] %v194, 128
        %541 = vxpose.xlu0.b32.cont [3/16] %v198, 128
        %542 = vxpose.xlu0.b32.cont [4/16] %v202, 128
        %543 = vxpose.xlu0.b32.cont [5/16] %v206, 128
        %544 = vxpose.xlu0.b32.cont [6/16] %v210, 128
        %545 = vxpose.xlu0.b32.cont [7/16] %v214, 128
        %546 = vxpose.xlu0.b32.cont [8/16] %v218, 128
        %547 = vxpose.xlu0.b32.cont [9/16] %v222, 128
        %548 = vxpose.xlu0.b32.cont [10/16] %v226, 128
        %549 = vxpose.xlu0.b32.cont [11/16] %v230, 128
        %550 = vxpose.xlu0.b32.cont [12/16] %v234, 128
        %551 = vxpose.xlu0.b32.cont [13/16] %v238, 128
        %552 = vxpose.xlu0.b32.cont [14/16] %v242, 128
        %553 = vxpose.xlu0.b32.cont [15/16] %v246, 128
        %554 = vxpose.xlu0.b32.end [16/16] %v250, 128
        %v555 = vpop.trf.xlu0
        %v556 = vpop.trf.xlu0
        %v557 = vpop.trf.xlu0
        %v558 = vpop.trf.xlu0
        %v559 = vpop.trf.xlu0
        %v560 = vpop.trf.xlu0
        %v561 = vpop.trf.xlu0
        %v562 = vpop.trf.xlu0
        %v563 = vpop.trf.xlu0
        %v564 = vpop.trf.xlu0
        %v565 = vpop.trf.xlu0
        %v566 = vpop.trf.xlu0
        %v567 = vpop.trf.xlu0
        %v568 = vpop.trf.xlu0
        %v569 = vpop.trf.xlu0
        %v570 = vpop.trf.xlu0
        %571 = vxpose.xlu0.b32.start [1/16] %v251, 128
        %572 = vxpose.xlu0.b32.cont [2/16] %v255, 128
        %573 = vxpose.xlu0.b32.cont [3/16] %v259, 128
        %574 = vxpose.xlu0.b32.cont [4/16] %v263, 128
        %575 = vxpose.xlu0.b32.cont [5/16] %v267, 128
        %576 = vxpose.xlu0.b32.cont [6/16] %v271, 128
        %577 = vxpose.xlu0.b32.cont [7/16] %v275, 128
        %578 = vxpose.xlu0.b32.cont [8/16] %v279, 128
        %579 = vxpose.xlu0.b32.cont [9/16] %v283, 128
        %580 = vxpose.xlu0.b32.cont [10/16] %v287, 128
        %581 = vxpose.xlu0.b32.cont [11/16] %v291, 128
        %582 = vxpose.xlu0.b32.cont [12/16] %v295, 128
        %583 = vxpose.xlu0.b32.cont [13/16] %v299, 128
        %584 = vxpose.xlu0.b32.cont [14/16] %v303, 128
        %585 = vxpose.xlu0.b32.cont [15/16] %v307, 128
        %586 = vxpose.xlu0.b32.end [16/16] %v311, 128
        %v587 = vpop.trf.xlu0
        %v588 = vpop.trf.xlu0
        %v589 = vpop.trf.xlu0
        %v590 = vpop.trf.xlu0
        %v591 = vpop.trf.xlu0
        %v592 = vpop.trf.xlu0
        %v593 = vpop.trf.xlu0
        %v594 = vpop.trf.xlu0
        %v595 = vpop.trf.xlu0
        %v596 = vpop.trf.xlu0
        %v597 = vpop.trf.xlu0
        %v598 = vpop.trf.xlu0
        %v599 = vpop.trf.xlu0
        %v600 = vpop.trf.xlu0
        %v601 = vpop.trf.xlu0
        %v602 = vpop.trf.xlu0
        %603 = vxpose.xlu0.b32.start [1/16] %v252, 128
        %604 = vxpose.xlu0.b32.cont [2/16] %v256, 128
        %605 = vxpose.xlu0.b32.cont [3/16] %v260, 128
        %606 = vxpose.xlu0.b32.cont [4/16] %v264, 128
        %607 = vxpose.xlu0.b32.cont [5/16] %v268, 128
        %608 = vxpose.xlu0.b32.cont [6/16] %v272, 128
        %609 = vxpose.xlu0.b32.cont [7/16] %v276, 128
        %610 = vxpose.xlu0.b32.cont [8/16] %v280, 128
        %611 = vxpose.xlu0.b32.cont [9/16] %v284, 128
        %612 = vxpose.xlu0.b32.cont [10/16] %v288, 128
        %613 = vxpose.xlu0.b32.cont [11/16] %v292, 128
        %614 = vxpose.xlu0.b32.cont [12/16] %v296, 128
        %615 = vxpose.xlu0.b32.cont [13/16] %v300, 128
        %616 = vxpose.xlu0.b32.cont [14/16] %v304, 128
        %617 = vxpose.xlu0.b32.cont [15/16] %v308, 128
        %618 = vxpose.xlu0.b32.end [16/16] %v312, 128
        %v619 = vpop.trf.xlu0
        %v620 = vpop.trf.xlu0
        %v621 = vpop.trf.xlu0
        %v622 = vpop.trf.xlu0
        %v623 = vpop.trf.xlu0
        %v624 = vpop.trf.xlu0
        %v625 = vpop.trf.xlu0
        %v626 = vpop.trf.xlu0
        %v627 = vpop.trf.xlu0
        %v628 = vpop.trf.xlu0
        %v629 = vpop.trf.xlu0
        %v630 = vpop.trf.xlu0
        %v631 = vpop.trf.xlu0
        %v632 = vpop.trf.xlu0
        %v633 = vpop.trf.xlu0
        %v634 = vpop.trf.xlu0
        %635 = vxpose.xlu0.b32.start [1/16] %v253, 128
        %636 = vxpose.xlu0.b32.cont [2/16] %v257, 128
        %637 = vxpose.xlu0.b32.cont [3/16] %v261, 128
        %638 = vxpose.xlu0.b32.cont [4/16] %v265, 128
        %639 = vxpose.xlu0.b32.cont [5/16] %v269, 128
        %640 = vxpose.xlu0.b32.cont [6/16] %v273, 128
        %641 = vxpose.xlu0.b32.cont [7/16] %v277, 128
        %642 = vxpose.xlu0.b32.cont [8/16] %v281, 128
        %643 = vxpose.xlu0.b32.cont [9/16] %v285, 128
        %644 = vxpose.xlu0.b32.cont [10/16] %v289, 128
        %645 = vxpose.xlu0.b32.cont [11/16] %v293, 128
        %646 = vxpose.xlu0.b32.cont [12/16] %v297, 128
        %647 = vxpose.xlu0.b32.cont [13/16] %v301, 128
        %648 = vxpose.xlu0.b32.cont [14/16] %v305, 128
        %649 = vxpose.xlu0.b32.cont [15/16] %v309, 128
        %650 = vxpose.xlu0.b32.end [16/16] %v313, 128
        %v651 = vpop.trf.xlu0
        %v652 = vpop.trf.xlu0
        %v653 = vpop.trf.xlu0
        %v654 = vpop.trf.xlu0
        %v655 = vpop.trf.xlu0
        %v656 = vpop.trf.xlu0
        %v657 = vpop.trf.xlu0
        %v658 = vpop.trf.xlu0
        %v659 = vpop.trf.xlu0
        %v660 = vpop.trf.xlu0
        %v661 = vpop.trf.xlu0
        %v662 = vpop.trf.xlu0
        %v663 = vpop.trf.xlu0
        %v664 = vpop.trf.xlu0
        %v665 = vpop.trf.xlu0
        %v666 = vpop.trf.xlu0
        %667 = vxpose.xlu0.b32.start [1/16] %v254, 128
        %668 = vxpose.xlu0.b32.cont [2/16] %v258, 128
        %669 = vxpose.xlu0.b32.cont [3/16] %v262, 128
        %670 = vxpose.xlu0.b32.cont [4/16] %v266, 128
        %671 = vxpose.xlu0.b32.cont [5/16] %v270, 128
        %672 = vxpose.xlu0.b32.cont [6/16] %v274, 128
        %673 = vxpose.xlu0.b32.cont [7/16] %v278, 128
        %674 = vxpose.xlu0.b32.cont [8/16] %v282, 128
        %675 = vxpose.xlu0.b32.cont [9/16] %v286, 128
        %676 = vxpose.xlu0.b32.cont [10/16] %v290, 128
        %677 = vxpose.xlu0.b32.cont [11/16] %v294, 128
        %678 = vxpose.xlu0.b32.cont [12/16] %v298, 128
        %679 = vxpose.xlu0.b32.cont [13/16] %v302, 128
        %680 = vxpose.xlu0.b32.cont [14/16] %v306, 128
        %681 = vxpose.xlu0.b32.cont [15/16] %v310, 128
        %682 = vxpose.xlu0.b32.end [16/16] %v314, 128
        %v683 = vpop.trf.xlu0
        %v684 = vpop.trf.xlu0
        %v685 = vpop.trf.xlu0
        %v686 = vpop.trf.xlu0
        %v687 = vpop.trf.xlu0
        %v688 = vpop.trf.xlu0
        %v689 = vpop.trf.xlu0
        %v690 = vpop.trf.xlu0
        %v691 = vpop.trf.xlu0
        %v692 = vpop.trf.xlu0
        %v693 = vpop.trf.xlu0
        %v694 = vpop.trf.xlu0
        %v695 = vpop.trf.xlu0
        %v696 = vpop.trf.xlu0
        %v697 = vpop.trf.xlu0
        %v698 = vpop.trf.xlu0
        %699 = vxpose.xlu0.b32.start [1/16] %v315, 128
        %700 = vxpose.xlu0.b32.cont [2/16] %v319, 128
        %701 = vxpose.xlu0.b32.cont [3/16] %v323, 128
        %702 = vxpose.xlu0.b32.cont [4/16] %v327, 128
        %703 = vxpose.xlu0.b32.cont [5/16] %v331, 128
        %704 = vxpose.xlu0.b32.cont [6/16] %v335, 128
        %705 = vxpose.xlu0.b32.cont [7/16] %v339, 128
        %706 = vxpose.xlu0.b32.cont [8/16] %v343, 128
        %707 = vxpose.xlu0.b32.cont [9/16] %v347, 128
        %708 = vxpose.xlu0.b32.cont [10/16] %v351, 128
        %709 = vxpose.xlu0.b32.cont [11/16] %v355, 128
        %710 = vxpose.xlu0.b32.cont [12/16] %v359, 128
        %711 = vxpose.xlu0.b32.cont [13/16] %v363, 128
        %712 = vxpose.xlu0.b32.cont [14/16] %v367, 128
        %713 = vxpose.xlu0.b32.cont [15/16] %v371, 128
        %714 = vxpose.xlu0.b32.end [16/16] %v375, 128
        %v715 = vpop.trf.xlu0
        %v716 = vpop.trf.xlu0
        %v717 = vpop.trf.xlu0
        %v718 = vpop.trf.xlu0
        %v719 = vpop.trf.xlu0
        %v720 = vpop.trf.xlu0
        %v721 = vpop.trf.xlu0
        %v722 = vpop.trf.xlu0
        %v723 = vpop.trf.xlu0
        %v724 = vpop.trf.xlu0
        %v725 = vpop.trf.xlu0
        %v726 = vpop.trf.xlu0
        %v727 = vpop.trf.xlu0
        %v728 = vpop.trf.xlu0
        %v729 = vpop.trf.xlu0
        %v730 = vpop.trf.xlu0
        %731 = vxpose.xlu0.b32.start [1/16] %v316, 128
        %732 = vxpose.xlu0.b32.cont [2/16] %v320, 128
        %733 = vxpose.xlu0.b32.cont [3/16] %v324, 128
        %734 = vxpose.xlu0.b32.cont [4/16] %v328, 128
        %735 = vxpose.xlu0.b32.cont [5/16] %v332, 128
        %736 = vxpose.xlu0.b32.cont [6/16] %v336, 128
        %737 = vxpose.xlu0.b32.cont [7/16] %v340, 128
        %738 = vxpose.xlu0.b32.cont [8/16] %v344, 128
        %739 = vxpose.xlu0.b32.cont [9/16] %v348, 128
        %740 = vxpose.xlu0.b32.cont [10/16] %v352, 128
        %741 = vxpose.xlu0.b32.cont [11/16] %v356, 128
        %742 = vxpose.xlu0.b32.cont [12/16] %v360, 128
        %743 = vxpose.xlu0.b32.cont [13/16] %v364, 128
        %744 = vxpose.xlu0.b32.cont [14/16] %v368, 128
        %745 = vxpose.xlu0.b32.cont [15/16] %v372, 128
        %746 = vxpose.xlu0.b32.end [16/16] %v376, 128
        %v747 = vpop.trf.xlu0
        %v748 = vpop.trf.xlu0
        %v749 = vpop.trf.xlu0
        %v750 = vpop.trf.xlu0
        %v751 = vpop.trf.xlu0
        %v752 = vpop.trf.xlu0
        %v753 = vpop.trf.xlu0
        %v754 = vpop.trf.xlu0
        %v755 = vpop.trf.xlu0
        %v756 = vpop.trf.xlu0
        %v757 = vpop.trf.xlu0
        %v758 = vpop.trf.xlu0
        %v759 = vpop.trf.xlu0
        %v760 = vpop.trf.xlu0
        %v761 = vpop.trf.xlu0
        %v762 = vpop.trf.xlu0
        %763 = vxpose.xlu0.b32.start [1/16] %v317, 128
        %764 = vxpose.xlu0.b32.cont [2/16] %v321, 128
        %765 = vxpose.xlu0.b32.cont [3/16] %v325, 128
        %766 = vxpose.xlu0.b32.cont [4/16] %v329, 128
        %767 = vxpose.xlu0.b32.cont [5/16] %v333, 128
        %768 = vxpose.xlu0.b32.cont [6/16] %v337, 128
        %769 = vxpose.xlu0.b32.cont [7/16] %v341, 128
        %770 = vxpose.xlu0.b32.cont [8/16] %v345, 128
        %771 = vxpose.xlu0.b32.cont [9/16] %v349, 128
        %772 = vxpose.xlu0.b32.cont [10/16] %v353, 128
        %773 = vxpose.xlu0.b32.cont [11/16] %v357, 128
        %774 = vxpose.xlu0.b32.cont [12/16] %v361, 128
        %775 = vxpose.xlu0.b32.cont [13/16] %v365, 128
        %776 = vxpose.xlu0.b32.cont [14/16] %v369, 128
        %777 = vxpose.xlu0.b32.cont [15/16] %v373, 128
        %778 = vxpose.xlu0.b32.end [16/16] %v377, 128
        %v779 = vpop.trf.xlu0
        %v780 = vpop.trf.xlu0
        %v781 = vpop.trf.xlu0
        %v782 = vpop.trf.xlu0
        %v783 = vpop.trf.xlu0
        %v784 = vpop.trf.xlu0
        %v785 = vpop.trf.xlu0
        %v786 = vpop.trf.xlu0
        %v787 = vpop.trf.xlu0
        %v788 = vpop.trf.xlu0
        %v789 = vpop.trf.xlu0
        %v790 = vpop.trf.xlu0
        %v791 = vpop.trf.xlu0
        %v792 = vpop.trf.xlu0
        %v793 = vpop.trf.xlu0
        %v794 = vpop.trf.xlu0
        %795 = vxpose.xlu0.b32.start [1/16] %v318, 128
        %796 = vxpose.xlu0.b32.cont [2/16] %v322, 128
        %797 = vxpose.xlu0.b32.cont [3/16] %v326, 128
        %798 = vxpose.xlu0.b32.cont [4/16] %v330, 128
        %799 = vxpose.xlu0.b32.cont [5/16] %v334, 128
        %800 = vxpose.xlu0.b32.cont [6/16] %v338, 128
        %801 = vxpose.xlu0.b32.cont [7/16] %v342, 128
        %802 = vxpose.xlu0.b32.cont [8/16] %v346, 128
        %803 = vxpose.xlu0.b32.cont [9/16] %v350, 128
        %804 = vxpose.xlu0.b32.cont [10/16] %v354, 128
        %805 = vxpose.xlu0.b32.cont [11/16] %v358, 128
        %806 = vxpose.xlu0.b32.cont [12/16] %v362, 128
        %807 = vxpose.xlu0.b32.cont [13/16] %v366, 128
        %808 = vxpose.xlu0.b32.cont [14/16] %v370, 128
        %809 = vxpose.xlu0.b32.cont [15/16] %v374, 128
        %810 = vxpose.xlu0.b32.end [16/16] %v378, 128
        %v811 = vpop.trf.xlu0
        %v812 = vpop.trf.xlu0
        %v813 = vpop.trf.xlu0
        %v814 = vpop.trf.xlu0
        %v815 = vpop.trf.xlu0
        %v816 = vpop.trf.xlu0
        %v817 = vpop.trf.xlu0
        %v818 = vpop.trf.xlu0
        %v819 = vpop.trf.xlu0
        %v820 = vpop.trf.xlu0
        %v821 = vpop.trf.xlu0
        %v822 = vpop.trf.xlu0
        %v823 = vpop.trf.xlu0
        %v824 = vpop.trf.xlu0
        %v825 = vpop.trf.xlu0
        %v826 = vpop.trf.xlu0
        %827 = vxpose.xlu0.b32.start [1/16] %v379, 128
        %828 = vxpose.xlu0.b32.cont [2/16] %v383, 128
        %829 = vxpose.xlu0.b32.cont [3/16] %v387, 128
        %830 = vxpose.xlu0.b32.cont [4/16] %v391, 128
        %831 = vxpose.xlu0.b32.cont [5/16] %v395, 128
        %832 = vxpose.xlu0.b32.cont [6/16] %v399, 128
        %833 = vxpose.xlu0.b32.cont [7/16] %v403, 128
        %834 = vxpose.xlu0.b32.cont [8/16] %v407, 128
        %835 = vxpose.xlu0.b32.cont [9/16] %v411, 128
        %836 = vxpose.xlu0.b32.cont [10/16] %v415, 128
        %837 = vxpose.xlu0.b32.cont [11/16] %v419, 128
        %838 = vxpose.xlu0.b32.cont [12/16] %v423, 128
        %839 = vxpose.xlu0.b32.cont [13/16] %v427, 128
        %840 = vxpose.xlu0.b32.cont [14/16] %v431, 128
        %841 = vxpose.xlu0.b32.cont [15/16] %v435, 128
        %842 = vxpose.xlu0.b32.end [16/16] %v439, 128
        %v843 = vpop.trf.xlu0
        %v844 = vpop.trf.xlu0
        %v845 = vpop.trf.xlu0
        %v846 = vpop.trf.xlu0
        %v847 = vpop.trf.xlu0
        %v848 = vpop.trf.xlu0
        %v849 = vpop.trf.xlu0
        %v850 = vpop.trf.xlu0
        %v851 = vpop.trf.xlu0
        %v852 = vpop.trf.xlu0
        %v853 = vpop.trf.xlu0
        %v854 = vpop.trf.xlu0
        %v855 = vpop.trf.xlu0
        %v856 = vpop.trf.xlu0
        %v857 = vpop.trf.xlu0
        %v858 = vpop.trf.xlu0
        %859 = vxpose.xlu0.b32.start [1/16] %v380, 128
        %860 = vxpose.xlu0.b32.cont [2/16] %v384, 128
        %861 = vxpose.xlu0.b32.cont [3/16] %v388, 128
        %862 = vxpose.xlu0.b32.cont [4/16] %v392, 128
        %863 = vxpose.xlu0.b32.cont [5/16] %v396, 128
        %864 = vxpose.xlu0.b32.cont [6/16] %v400, 128
        %865 = vxpose.xlu0.b32.cont [7/16] %v404, 128
        %866 = vxpose.xlu0.b32.cont [8/16] %v408, 128
        %867 = vxpose.xlu0.b32.cont [9/16] %v412, 128
        %868 = vxpose.xlu0.b32.cont [10/16] %v416, 128
        %869 = vxpose.xlu0.b32.cont [11/16] %v420, 128
        %870 = vxpose.xlu0.b32.cont [12/16] %v424, 128
        %871 = vxpose.xlu0.b32.cont [13/16] %v428, 128
        %872 = vxpose.xlu0.b32.cont [14/16] %v432, 128
        %873 = vxpose.xlu0.b32.cont [15/16] %v436, 128
        %874 = vxpose.xlu0.b32.end [16/16] %v440, 128
        %v875 = vpop.trf.xlu0
        %v876 = vpop.trf.xlu0
        %v877 = vpop.trf.xlu0
        %v878 = vpop.trf.xlu0
        %v879 = vpop.trf.xlu0
        %v880 = vpop.trf.xlu0
        %v881 = vpop.trf.xlu0
        %v882 = vpop.trf.xlu0
        %v883 = vpop.trf.xlu0
        %v884 = vpop.trf.xlu0
        %v885 = vpop.trf.xlu0
        %v886 = vpop.trf.xlu0
        %v887 = vpop.trf.xlu0
        %v888 = vpop.trf.xlu0
        %v889 = vpop.trf.xlu0
        %v890 = vpop.trf.xlu0
        %891 = vxpose.xlu0.b32.start [1/16] %v381, 128
        %892 = vxpose.xlu0.b32.cont [2/16] %v385, 128
        %893 = vxpose.xlu0.b32.cont [3/16] %v389, 128
        %894 = vxpose.xlu0.b32.cont [4/16] %v393, 128
        %895 = vxpose.xlu0.b32.cont [5/16] %v397, 128
        %896 = vxpose.xlu0.b32.cont [6/16] %v401, 128
        %897 = vxpose.xlu0.b32.cont [7/16] %v405, 128
        %898 = vxpose.xlu0.b32.cont [8/16] %v409, 128
        %899 = vxpose.xlu0.b32.cont [9/16] %v413, 128
        %900 = vxpose.xlu0.b32.cont [10/16] %v417, 128
        %901 = vxpose.xlu0.b32.cont [11/16] %v421, 128
        %902 = vxpose.xlu0.b32.cont [12/16] %v425, 128
        %903 = vxpose.xlu0.b32.cont [13/16] %v429, 128
        %904 = vxpose.xlu0.b32.cont [14/16] %v433, 128
        %905 = vxpose.xlu0.b32.cont [15/16] %v437, 128
        %906 = vxpose.xlu0.b32.end [16/16] %v441, 128
        %v907 = vpop.trf.xlu0
        %v908 = vpop.trf.xlu0
        %v909 = vpop.trf.xlu0
        %v910 = vpop.trf.xlu0
        %v911 = vpop.trf.xlu0
        %v912 = vpop.trf.xlu0
        %v913 = vpop.trf.xlu0
        %v914 = vpop.trf.xlu0
        %v915 = vpop.trf.xlu0
        %v916 = vpop.trf.xlu0
        %v917 = vpop.trf.xlu0
        %v918 = vpop.trf.xlu0
        %v919 = vpop.trf.xlu0
        %v920 = vpop.trf.xlu0
        %v921 = vpop.trf.xlu0
        %v922 = vpop.trf.xlu0
        %923 = vxpose.xlu0.b32.start [1/16] %v382, 128
        %924 = vxpose.xlu0.b32.cont [2/16] %v386, 128
        %925 = vxpose.xlu0.b32.cont [3/16] %v390, 128
        %926 = vxpose.xlu0.b32.cont [4/16] %v394, 128
        %927 = vxpose.xlu0.b32.cont [5/16] %v398, 128
        %928 = vxpose.xlu0.b32.cont [6/16] %v402, 128
        %929 = vxpose.xlu0.b32.cont [7/16] %v406, 128
        %930 = vxpose.xlu0.b32.cont [8/16] %v410, 128
        %931 = vxpose.xlu0.b32.cont [9/16] %v414, 128
        %932 = vxpose.xlu0.b32.cont [10/16] %v418, 128
        %933 = vxpose.xlu0.b32.cont [11/16] %v422, 128
        %934 = vxpose.xlu0.b32.cont [12/16] %v426, 128
        %935 = vxpose.xlu0.b32.cont [13/16] %v430, 128
        %936 = vxpose.xlu0.b32.cont [14/16] %v434, 128
        %937 = vxpose.xlu0.b32.cont [15/16] %v438, 128
        %938 = vxpose.xlu0.b32.end [16/16] %v442, 128
        %v939 = vpop.trf.xlu0
        %v940 = vpop.trf.xlu0
        %v941 = vpop.trf.xlu0
        %v942 = vpop.trf.xlu0
        %v943 = vpop.trf.xlu0
        %v944 = vpop.trf.xlu0
        %v945 = vpop.trf.xlu0
        %v946 = vpop.trf.xlu0
        %v947 = vpop.trf.xlu0
        %v948 = vpop.trf.xlu0
        %v949 = vpop.trf.xlu0
        %v950 = vpop.trf.xlu0
        %v951 = vpop.trf.xlu0
        %v952 = vpop.trf.xlu0
        %v953 = vpop.trf.xlu0
        %v954 = vpop.trf.xlu0
        %955 = vst [vmem:[%s173] sm:$0xff] %v459
        %956 = vst [vmem:[%s173 + $0x8] sm:$0xff] %v587
        %957 = vst [vmem:[%s173 + $0x10] sm:$0xff] %v715
        %958 = vst [vmem:[%s173 + $0x18] sm:$0xff] %v843
        %959 = vst [vmem:[%s173 + $0x20] sm:$0xff] %v460
        %960 = vst [vmem:[%s173 + $0x28] sm:$0xff] %v588
        %961 = vst [vmem:[%s173 + $0x30] sm:$0xff] %v716
        %962 = vst [vmem:[%s173 + $0x38] sm:$0xff] %v844
        %963 = vst [vmem:[%s173 + $0x40] sm:$0xff] %v461
        %964 = vst [vmem:[%s173 + $0x48] sm:$0xff] %v589
        %965 = vst [vmem:[%s173 + $0x50] sm:$0xff] %v717
        %966 = vst [vmem:[%s173 + $0x58] sm:$0xff] %v845
        %967 = vst [vmem:[%s173 + $0x60] sm:$0xff] %v462
        %968 = vst [vmem:[%s173 + $0x68] sm:$0xff] %v590
        %969 = vst [vmem:[%s173 + $0x70] sm:$0xff] %v718
        %970 = vst [vmem:[%s173 + $0x78] sm:$0xff] %v846
        %971 = vst [vmem:[%s173 + $0x80] sm:$0xff] %v463
        %972 = vst [vmem:[%s173 + $0x88] sm:$0xff] %v591
        %973 = vst [vmem:[%s173 + $0x90] sm:$0xff] %v719
        %974 = vst [vmem:[%s173 + $0x98] sm:$0xff] %v847
        %975 = vst [vmem:[%s173 + $0xa0] sm:$0xff] %v464
        %976 = vst [vmem:[%s173 + $0xa8] sm:$0xff] %v592
        %977 = vst [vmem:[%s173 + $0xb0] sm:$0xff] %v720
        %978 = vst [vmem:[%s173 + $0xb8] sm:$0xff] %v848
        %979 = vst [vmem:[%s173 + $0xc0] sm:$0xff] %v465
        %980 = vst [vmem:[%s173 + $0xc8] sm:$0xff] %v593
        %981 = vst [vmem:[%s173 + $0xd0] sm:$0xff] %v721
        %982 = vst [vmem:[%s173 + $0xd8] sm:$0xff] %v849
        %983 = vst [vmem:[%s173 + $0xe0] sm:$0xff] %v466
        %984 = vst [vmem:[%s173 + $0xe8] sm:$0xff] %v594
        %985 = vst [vmem:[%s173 + $0xf0] sm:$0xff] %v722
        %986 = vst [vmem:[%s173 + $0xf8] sm:$0xff] %v850
        %987 = vst [vmem:[%s173 + $0x100] sm:$0xff] %v467
        %988 = vst [vmem:[%s173 + $0x108] sm:$0xff] %v595
        %989 = vst [vmem:[%s173 + $0x110] sm:$0xff] %v723
        %990 = vst [vmem:[%s173 + $0x118] sm:$0xff] %v851
        %991 = vst [vmem:[%s173 + $0x120] sm:$0xff] %v468
        %992 = vst [vmem:[%s173 + $0x128] sm:$0xff] %v596
        %993 = vst [vmem:[%s173 + $0x130] sm:$0xff] %v724
        %994 = vst [vmem:[%s173 + $0x138] sm:$0xff] %v852
        %995 = vst [vmem:[%s173 + $0x140] sm:$0xff] %v469
        %996 = vst [vmem:[%s173 + $0x148] sm:$0xff] %v597
        %997 = vst [vmem:[%s173 + $0x150] sm:$0xff] %v725
        %998 = vst [vmem:[%s173 + $0x158] sm:$0xff] %v853
        %999 = vst [vmem:[%s173 + $0x160] sm:$0xff] %v470
        %1000 = vst [vmem:[%s173 + $0x168] sm:$0xff] %v598
        %1001 = vst [vmem:[%s173 + $0x170] sm:$0xff] %v726
        %1002 = vst [vmem:[%s173 + $0x178] sm:$0xff] %v854
        %1003 = vst [vmem:[%s173 + $0x180] sm:$0xff] %v471
        %1004 = vst [vmem:[%s173 + $0x188] sm:$0xff] %v599
        %1005 = vst [vmem:[%s173 + $0x190] sm:$0xff] %v727
        %1006 = vst [vmem:[%s173 + $0x198] sm:$0xff] %v855
        %1007 = vst [vmem:[%s173 + $0x1a0] sm:$0xff] %v472
        %1008 = vst [vmem:[%s173 + $0x1a8] sm:$0xff] %v600
        %1009 = vst [vmem:[%s173 + $0x1b0] sm:$0xff] %v728
        %1010 = vst [vmem:[%s173 + $0x1b8] sm:$0xff] %v856
        %1011 = vst [vmem:[%s173 + $0x1c0] sm:$0xff] %v473
        %1012 = vst [vmem:[%s173 + $0x1c8] sm:$0xff] %v601
        %1013 = vst [vmem:[%s173 + $0x1d0] sm:$0xff] %v729
        %1014 = vst [vmem:[%s173 + $0x1d8] sm:$0xff] %v857
        %1015 = vst [vmem:[%s173 + $0x1e0] sm:$0xff] %v474
        %1016 = vst [vmem:[%s173 + $0x1e8] sm:$0xff] %v602
        %1017 = vst [vmem:[%s173 + $0x1f0] sm:$0xff] %v730
        %1018 = vst [vmem:[%s173 + $0x1f8] sm:$0xff] %v858
        %1019 = vst [vmem:[%s173 + $0x200] sm:$0xff] %v491
        %1020 = vst [vmem:[%s173 + $0x208] sm:$0xff] %v619
        %1021 = vst [vmem:[%s173 + $0x210] sm:$0xff] %v747
        %1022 = vst [vmem:[%s173 + $0x218] sm:$0xff] %v875
        %1023 = vst [vmem:[%s173 + $0x220] sm:$0xff] %v492
        %1024 = vst [vmem:[%s173 + $0x228] sm:$0xff] %v620
        %1025 = vst [vmem:[%s173 + $0x230] sm:$0xff] %v748
        %1026 = vst [vmem:[%s173 + $0x238] sm:$0xff] %v876
        %1027 = vst [vmem:[%s173 + $0x240] sm:$0xff] %v493
        %1028 = vst [vmem:[%s173 + $0x248] sm:$0xff] %v621
        %1029 = vst [vmem:[%s173 + $0x250] sm:$0xff] %v749
        %1030 = vst [vmem:[%s173 + $0x258] sm:$0xff] %v877
        %1031 = vst [vmem:[%s173 + $0x260] sm:$0xff] %v494
        %1032 = vst [vmem:[%s173 + $0x268] sm:$0xff] %v622
        %1033 = vst [vmem:[%s173 + $0x270] sm:$0xff] %v750
        %1034 = vst [vmem:[%s173 + $0x278] sm:$0xff] %v878
        %1035 = vst [vmem:[%s173 + $0x280] sm:$0xff] %v495
        %1036 = vst [vmem:[%s173 + $0x288] sm:$0xff] %v623
        %1037 = vst [vmem:[%s173 + $0x290] sm:$0xff] %v751
        %1038 = vst [vmem:[%s173 + $0x298] sm:$0xff] %v879
        %1039 = vst [vmem:[%s173 + $0x2a0] sm:$0xff] %v496
        %1040 = vst [vmem:[%s173 + $0x2a8] sm:$0xff] %v624
        %1041 = vst [vmem:[%s173 + $0x2b0] sm:$0xff] %v752
        %1042 = vst [vmem:[%s173 + $0x2b8] sm:$0xff] %v880
        %1043 = vst [vmem:[%s173 + $0x2c0] sm:$0xff] %v497
        %1044 = vst [vmem:[%s173 + $0x2c8] sm:$0xff] %v625
        %1045 = vst [vmem:[%s173 + $0x2d0] sm:$0xff] %v753
        %1046 = vst [vmem:[%s173 + $0x2d8] sm:$0xff] %v881
        %1047 = vst [vmem:[%s173 + $0x2e0] sm:$0xff] %v498
        %1048 = vst [vmem:[%s173 + $0x2e8] sm:$0xff] %v626
        %1049 = vst [vmem:[%s173 + $0x2f0] sm:$0xff] %v754
        %1050 = vst [vmem:[%s173 + $0x2f8] sm:$0xff] %v882
        %1051 = vst [vmem:[%s173 + $0x300] sm:$0xff] %v499
        %1052 = vst [vmem:[%s173 + $0x308] sm:$0xff] %v627
        %1053 = vst [vmem:[%s173 + $0x310] sm:$0xff] %v755
        %1054 = vst [vmem:[%s173 + $0x318] sm:$0xff] %v883
        %1055 = vst [vmem:[%s173 + $0x320] sm:$0xff] %v500
        %1056 = vst [vmem:[%s173 + $0x328] sm:$0xff] %v628
        %1057 = vst [vmem:[%s173 + $0x330] sm:$0xff] %v756
        %1058 = vst [vmem:[%s173 + $0x338] sm:$0xff] %v884
        %1059 = vst [vmem:[%s173 + $0x340] sm:$0xff] %v501
        %1060 = vst [vmem:[%s173 + $0x348] sm:$0xff] %v629
        %1061 = vst [vmem:[%s173 + $0x350] sm:$0xff] %v757
        %1062 = vst [vmem:[%s173 + $0x358] sm:$0xff] %v885
        %1063 = vst [vmem:[%s173 + $0x360] sm:$0xff] %v502
        %1064 = vst [vmem:[%s173 + $0x368] sm:$0xff] %v630
        %1065 = vst [vmem:[%s173 + $0x370] sm:$0xff] %v758
        %1066 = vst [vmem:[%s173 + $0x378] sm:$0xff] %v886
        %1067 = vst [vmem:[%s173 + $0x380] sm:$0xff] %v503
        %1068 = vst [vmem:[%s173 + $0x388] sm:$0xff] %v631
        %1069 = vst [vmem:[%s173 + $0x390] sm:$0xff] %v759
        %1070 = vst [vmem:[%s173 + $0x398] sm:$0xff] %v887
        %1071 = vst [vmem:[%s173 + $0x3a0] sm:$0xff] %v504
        %1072 = vst [vmem:[%s173 + $0x3a8] sm:$0xff] %v632
        %1073 = vst [vmem:[%s173 + $0x3b0] sm:$0xff] %v760
        %1074 = vst [vmem:[%s173 + $0x3b8] sm:$0xff] %v888
        %1075 = vst [vmem:[%s173 + $0x3c0] sm:$0xff] %v505
        %1076 = vst [vmem:[%s173 + $0x3c8] sm:$0xff] %v633
        %1077 = vst [vmem:[%s173 + $0x3d0] sm:$0xff] %v761
        %1078 = vst [vmem:[%s173 + $0x3d8] sm:$0xff] %v889
        %1079 = vst [vmem:[%s173 + $0x3e0] sm:$0xff] %v506
        %1080 = vst [vmem:[%s173 + $0x3e8] sm:$0xff] %v634
        %1081 = vst [vmem:[%s173 + $0x3f0] sm:$0xff] %v762
        %1082 = vst [vmem:[%s173 + $0x3f8] sm:$0xff] %v890
        %1083 = vst [vmem:[%s173 + $0x400] sm:$0xff] %v523
        %1084 = vst [vmem:[%s173 + $0x408] sm:$0xff] %v651
        %1085 = vst [vmem:[%s173 + $0x410] sm:$0xff] %v779
        %1086 = vst [vmem:[%s173 + $0x418] sm:$0xff] %v907
        %1087 = vst [vmem:[%s173 + $0x420] sm:$0xff] %v524
        %1088 = vst [vmem:[%s173 + $0x428] sm:$0xff] %v652
        %1089 = vst [vmem:[%s173 + $0x430] sm:$0xff] %v780
        %1090 = vst [vmem:[%s173 + $0x438] sm:$0xff] %v908
        %1091 = vst [vmem:[%s173 + $0x440] sm:$0xff] %v525
        %1092 = vst [vmem:[%s173 + $0x448] sm:$0xff] %v653
        %1093 = vst [vmem:[%s173 + $0x450] sm:$0xff] %v781
        %1094 = vst [vmem:[%s173 + $0x458] sm:$0xff] %v909
        %1095 = vst [vmem:[%s173 + $0x460] sm:$0xff] %v526
        %1096 = vst [vmem:[%s173 + $0x468] sm:$0xff] %v654
        %1097 = vst [vmem:[%s173 + $0x470] sm:$0xff] %v782
        %1098 = vst [vmem:[%s173 + $0x478] sm:$0xff] %v910
        %1099 = vst [vmem:[%s173 + $0x480] sm:$0xff] %v527
        %1100 = vst [vmem:[%s173 + $0x488] sm:$0xff] %v655
        %1101 = vst [vmem:[%s173 + $0x490] sm:$0xff] %v783
        %1102 = vst [vmem:[%s173 + $0x498] sm:$0xff] %v911
        %1103 = vst [vmem:[%s173 + $0x4a0] sm:$0xff] %v528
        %1104 = vst [vmem:[%s173 + $0x4a8] sm:$0xff] %v656
        %1105 = vst [vmem:[%s173 + $0x4b0] sm:$0xff] %v784
        %1106 = vst [vmem:[%s173 + $0x4b8] sm:$0xff] %v912
        %1107 = vst [vmem:[%s173 + $0x4c0] sm:$0xff] %v529
        %1108 = vst [vmem:[%s173 + $0x4c8] sm:$0xff] %v657
        %1109 = vst [vmem:[%s173 + $0x4d0] sm:$0xff] %v785
        %1110 = vst [vmem:[%s173 + $0x4d8] sm:$0xff] %v913
        %1111 = vst [vmem:[%s173 + $0x4e0] sm:$0xff] %v530
        %1112 = vst [vmem:[%s173 + $0x4e8] sm:$0xff] %v658
        %1113 = vst [vmem:[%s173 + $0x4f0] sm:$0xff] %v786
        %1114 = vst [vmem:[%s173 + $0x4f8] sm:$0xff] %v914
        %1115 = vst [vmem:[%s173 + $0x500] sm:$0xff] %v531
        %1116 = vst [vmem:[%s173 + $0x508] sm:$0xff] %v659
        %1117 = vst [vmem:[%s173 + $0x510] sm:$0xff] %v787
        %1118 = vst [vmem:[%s173 + $0x518] sm:$0xff] %v915
        %1119 = vst [vmem:[%s173 + $0x520] sm:$0xff] %v532
        %1120 = vst [vmem:[%s173 + $0x528] sm:$0xff] %v660
        %1121 = vst [vmem:[%s173 + $0x530] sm:$0xff] %v788
        %1122 = vst [vmem:[%s173 + $0x538] sm:$0xff] %v916
        %1123 = vst [vmem:[%s173 + $0x540] sm:$0xff] %v533
        %1124 = vst [vmem:[%s173 + $0x548] sm:$0xff] %v661
        %1125 = vst [vmem:[%s173 + $0x550] sm:$0xff] %v789
        %1126 = vst [vmem:[%s173 + $0x558] sm:$0xff] %v917
        %1127 = vst [vmem:[%s173 + $0x560] sm:$0xff] %v534
        %1128 = vst [vmem:[%s173 + $0x568] sm:$0xff] %v662
        %1129 = vst [vmem:[%s173 + $0x570] sm:$0xff] %v790
        %1130 = vst [vmem:[%s173 + $0x578] sm:$0xff] %v918
        %1131 = vst [vmem:[%s173 + $0x580] sm:$0xff] %v535
        %1132 = vst [vmem:[%s173 + $0x588] sm:$0xff] %v663
        %1133 = vst [vmem:[%s173 + $0x590] sm:$0xff] %v791
        %1134 = vst [vmem:[%s173 + $0x598] sm:$0xff] %v919
        %1135 = vst [vmem:[%s173 + $0x5a0] sm:$0xff] %v536
        %1136 = vst [vmem:[%s173 + $0x5a8] sm:$0xff] %v664
        %1137 = vst [vmem:[%s173 + $0x5b0] sm:$0xff] %v792
        %1138 = vst [vmem:[%s173 + $0x5b8] sm:$0xff] %v920
        %1139 = vst [vmem:[%s173 + $0x5c0] sm:$0xff] %v537
        %1140 = vst [vmem:[%s173 + $0x5c8] sm:$0xff] %v665
        %1141 = vst [vmem:[%s173 + $0x5d0] sm:$0xff] %v793
        %1142 = vst [vmem:[%s173 + $0x5d8] sm:$0xff] %v921
        %1143 = vst [vmem:[%s173 + $0x5e0] sm:$0xff] %v538
        %1144 = vst [vmem:[%s173 + $0x5e8] sm:$0xff] %v666
        %1145 = vst [vmem:[%s173 + $0x5f0] sm:$0xff] %v794
        %1146 = vst [vmem:[%s173 + $0x5f8] sm:$0xff] %v922
        %1147 = vst [vmem:[%s173 + $0x600] sm:$0xff] %v555
        %1148 = vst [vmem:[%s173 + $0x608] sm:$0xff] %v683
        %1149 = vst [vmem:[%s173 + $0x610] sm:$0xff] %v811
        %1150 = vst [vmem:[%s173 + $0x618] sm:$0xff] %v939
        %1151 = vst [vmem:[%s173 + $0x620] sm:$0xff] %v556
        %1152 = vst [vmem:[%s173 + $0x628] sm:$0xff] %v684
        %1153 = vst [vmem:[%s173 + $0x630] sm:$0xff] %v812
        %1154 = vst [vmem:[%s173 + $0x638] sm:$0xff] %v940
        %1155 = vst [vmem:[%s173 + $0x640] sm:$0xff] %v557
        %1156 = vst [vmem:[%s173 + $0x648] sm:$0xff] %v685
        %1157 = vst [vmem:[%s173 + $0x650] sm:$0xff] %v813
        %1158 = vst [vmem:[%s173 + $0x658] sm:$0xff] %v941
        %1159 = vst [vmem:[%s173 + $0x660] sm:$0xff] %v558
        %1160 = vst [vmem:[%s173 + $0x668] sm:$0xff] %v686
        %1161 = vst [vmem:[%s173 + $0x670] sm:$0xff] %v814
        %1162 = vst [vmem:[%s173 + $0x678] sm:$0xff] %v942
        %1163 = vst [vmem:[%s173 + $0x680] sm:$0xff] %v559
        %1164 = vst [vmem:[%s173 + $0x688] sm:$0xff] %v687
        %1165 = vst [vmem:[%s173 + $0x690] sm:$0xff] %v815
        %1166 = vst [vmem:[%s173 + $0x698] sm:$0xff] %v943
        %1167 = vst [vmem:[%s173 + $0x6a0] sm:$0xff] %v560
        %1168 = vst [vmem:[%s173 + $0x6a8] sm:$0xff] %v688
        %1169 = vst [vmem:[%s173 + $0x6b0] sm:$0xff] %v816
        %1170 = vst [vmem:[%s173 + $0x6b8] sm:$0xff] %v944
        %1171 = vst [vmem:[%s173 + $0x6c0] sm:$0xff] %v561
        %1172 = vst [vmem:[%s173 + $0x6c8] sm:$0xff] %v689
        %1173 = vst [vmem:[%s173 + $0x6d0] sm:$0xff] %v817
        %1174 = vst [vmem:[%s173 + $0x6d8] sm:$0xff] %v945
        %1175 = vst [vmem:[%s173 + $0x6e0] sm:$0xff] %v562
        %1176 = vst [vmem:[%s173 + $0x6e8] sm:$0xff] %v690
        %1177 = vst [vmem:[%s173 + $0x6f0] sm:$0xff] %v818
        %1178 = vst [vmem:[%s173 + $0x6f8] sm:$0xff] %v946
        %1179 = vst [vmem:[%s173 + $0x700] sm:$0xff] %v563
        %1180 = vst [vmem:[%s173 + $0x708] sm:$0xff] %v691
        %1181 = vst [vmem:[%s173 + $0x710] sm:$0xff] %v819
        %1182 = vst [vmem:[%s173 + $0x718] sm:$0xff] %v947
        %1183 = vst [vmem:[%s173 + $0x720] sm:$0xff] %v564
        %1184 = vst [vmem:[%s173 + $0x728] sm:$0xff] %v692
        %1185 = vst [vmem:[%s173 + $0x730] sm:$0xff] %v820
        %1186 = vst [vmem:[%s173 + $0x738] sm:$0xff] %v948
        %1187 = vst [vmem:[%s173 + $0x740] sm:$0xff] %v565
        %1188 = vst [vmem:[%s173 + $0x748] sm:$0xff] %v693
        %1189 = vst [vmem:[%s173 + $0x750] sm:$0xff] %v821
        %1190 = vst [vmem:[%s173 + $0x758] sm:$0xff] %v949
        %1191 = vst [vmem:[%s173 + $0x760] sm:$0xff] %v566
        %1192 = vst [vmem:[%s173 + $0x768] sm:$0xff] %v694
        %1193 = vst [vmem:[%s173 + $0x770] sm:$0xff] %v822
        %1194 = vst [vmem:[%s173 + $0x778] sm:$0xff] %v950
        %1195 = vst [vmem:[%s173 + $0x780] sm:$0xff] %v567
        %1196 = vst [vmem:[%s173 + $0x788] sm:$0xff] %v695
        %1197 = vst [vmem:[%s173 + $0x790] sm:$0xff] %v823
        %1198 = vst [vmem:[%s173 + $0x798] sm:$0xff] %v951
        %1199 = vst [vmem:[%s173 + $0x7a0] sm:$0xff] %v568
        %1200 = vst [vmem:[%s173 + $0x7a8] sm:$0xff] %v696
        %1201 = vst [vmem:[%s173 + $0x7b0] sm:$0xff] %v824
        %1202 = vst [vmem:[%s173 + $0x7b8] sm:$0xff] %v952
        %1203 = vst [vmem:[%s173 + $0x7c0] sm:$0xff] %v569
        %1204 = vst [vmem:[%s173 + $0x7c8] sm:$0xff] %v697
        %1205 = vst [vmem:[%s173 + $0x7d0] sm:$0xff] %v825
        %1206 = vst [vmem:[%s173 + $0x7d8] sm:$0xff] %v953
        %1207 = vst [vmem:[%s173 + $0x7e0] sm:$0xff] %v570
        %1208 = vst [vmem:[%s173 + $0x7e8] sm:$0xff] %v698
        %1209 = vst [vmem:[%s173 + $0x7f0] sm:$0xff] %v826
        %1210 = vst [vmem:[%s173 + $0x7f8] sm:$0xff] %v954
        %s1211 = sand.u32 %s79, 1
        %s1212 = scalar_lea.sflag [#allocation4], %s1211
        %s1213 = sand.u32 %s79, 1
        %s1214 = smul.addr %s1213, 2048
        %s1215 = scalar_lea.vmem [#allocation5], %s1214
        // Predicated region
        $region29: #{tpu_custom_call.1} parent=23 // pred_check
          %p1216 = pneg %p89
        $region30: #{tpu_custom_call.1} parent=23 // pred_check_branch
          %1218 = sbr.rel (%p1216) target = $region32
        $region31: #{tpu_custom_call.1} parent=23 // pred_region
          %s1219 = smul.u32 64, %s24
          %s1220 = smul.u32 4, %s25
          %s1221 = ssub.s32 5, %s1220
          %p1222 = scmp.lt.s32.totalorder %s1221, 4
          %s1223 = scalar_select %p1222, %s1221, 4
          %s1224 = smul.u32 8192, %s1223
          %s1226 = ssub.s32 32768, %s1224
          %1227 = vsyncadd %s1212, %s1226
          %p1228 = scmp.ne.s32.totalorder 0, %s1224
          %s1229 = smul.addr %s1219, 5
          %s1230 = sadd.s32 %s1220, %s1229
          %s1231 = smul.addr %s23, 320
          %s1232 = sadd.s32 %s1230, %s1231
          %s1233 = smul.addr %s1232, 128
          %s1234 = scalar_lea.hbm %s1, %s1233
          %s1235 = smul.u32 %s1223, 8
          %s1236 = smul.u32 %s1235, 64
          %s1237 = sshll.u32 %s1215, 4
          %s1238 = int_to_ptr.vmem [resolvable:$true] %s1237
          %s1239 = sshll.u32 %s1236, 4
          %1243 = dma.vmem_to_hbm [thread:$0]  (%p1228), %s1238, %s1239, %s1234, %s1212, 512, 640, %s1235
        $region32: #{tpu_custom_call.1} parent=23 // pred_fallthru
          _
      $region24: #{tpu_custom_call.1} parent=5 // pred_fallthru
        _
      %p1244 = scmp.le.s32.totalorder 2, %s13
      // Predicated region
      $region33: #{tpu_custom_call.1} parent=5 // pred_check
        %p1245 = pneg %p1244
      $region34: #{tpu_custom_call.1} parent=5 // pred_check_branch
        %1247 = sbr.rel (%p1245) target = $region36
      $region35: #{tpu_custom_call.1} parent=5 // pred_region
        %s1248 = ssub.s32 %s13, 2
        // Predicated region
        $region37: #{tpu_custom_call.1} parent=35 // pred_check
          %p1249 = pneg %p95
        $region38: #{tpu_custom_call.1} parent=35 // pred_check_branch
          %1251 = sbr.rel (%p1249) target = $region40
        $region39: #{tpu_custom_call.1} parent=35 // pred_region
          %s1252 = sand.u32 %s80, 1
          %s1253 = scalar_lea.sflag [#allocation4], %s1252
          %s1254 = sand.u32 %s80, 1
          %s1255 = smul.addr %s1254, 2048
          %s1256 = scalar_lea.vmem [#allocation5], %s1255
          %1257 = dma.done %s1253, 32768
        $region40: #{tpu_custom_call.1} parent=35 // pred_fallthru
          _
      $region36: #{tpu_custom_call.1} parent=5 // pred_fallthru
        _
    $region6: #{tpu_custom_call.1} parent=1 // loop_footer
      %s17 = sadd.s32 1, %s13
    $region7: #{tpu_custom_call.1} parent=1 // loop_footer_branch
      %12 = sbr.rel target = $region3
    $region8: #{tpu_custom_call.1} parent=1 // loop_exit
      _
    %1258 = vsyncpa [#allocation3], 1
    %s1259 = scalar_lea.sflag [#allocation3], 1
    %1260 = vsyncpa %s1259, 1
    %1261 = vsyncpa [#allocation4], 1
    %s1262 = scalar_lea.sflag [#allocation4], 1
    %1263 = vsyncpa %s1262, 1

</llo_original>
